<compile_context>
chip_gen: v6e
topology: v6e:2x2x1
jax: 0.10.0
libtpu: 0.0.40
codegen_flags: <defaults>
</compile_context>

<pallas_src>
import jax
import jax.numpy as jnp
from jax.experimental import pallas as pl
from jax.experimental.pallas import tpu as pltpu


def _round_up(x, m):
    return (x + m - 1) // m * m


# ----------------------------------------------------------------------------
# Kernels
# ----------------------------------------------------------------------------
def _mlp_kernel_resident(x_ref, w1_ref, b1_ref, w2_ref, b2_ref, o_ref):
    """Weights-resident path: one grid axis over row tiles, whole W1/W2 in VMEM."""
    xb = x_ref[...].astype(w1_ref.dtype)                       # f32 -> bf16 on-tile
    h = jnp.dot(xb, w1_ref[...], preferred_element_type=jnp.float32)
    h = jnp.maximum(h + b1_ref[...], 0.0)
    # Dropout is identity in eval mode.
    # TODO(synk): training-mode dropout (pltpu.prng_random_bits mask) not emitted.
    o_ref[...] = (jnp.dot(h.astype(w2_ref.dtype), w2_ref[...],
                          preferred_element_type=jnp.float32)
                  + b2_ref[...]).astype(o_ref.dtype)


def _mlp_kernel_stream_f32(x_ref, w1_ref, b1_ref, w2_ref, b2_ref, o_ref):
    """Streaming path, f32 output: accumulate directly into o_ref (no scratch)."""
    j = pl.program_id(1)
    xb = x_ref[...].astype(w1_ref.dtype)
    h = jnp.dot(xb, w1_ref[...], preferred_element_type=jnp.float32)
    h = jnp.maximum(h + b1_ref[...], 0.0)
    partial = jnp.dot(h.astype(w2_ref.dtype), w2_ref[...],
                      preferred_element_type=jnp.float32)

    @pl.when(j == 0)
    def _init():
        o_ref[...] = partial + b2_ref[...]

    @pl.when(j > 0)
    def _acc():
        o_ref[...] += partial


def _mlp_kernel_stream_acc(x_ref, w1_ref, b1_ref, w2_ref, b2_ref, o_ref, acc_ref):
    """Streaming path, non-f32 output: f32 VMEM accumulator + finalize cast."""
    j = pl.program_id(1)

    @pl.when(j == 0)
    def _init():
        acc_ref[...] = jnp.zeros_like(acc_ref)

    xb = x_ref[...].astype(w1_ref.dtype)
    h = jnp.dot(xb, w1_ref[...], preferred_element_type=jnp.float32)
    h = jnp.maximum(h + b1_ref[...], 0.0)
    acc_ref[...] += jnp.dot(h.astype(w2_ref.dtype), w2_ref[...],
                            preferred_element_type=jnp.float32)

    @pl.when(j == pl.num_programs(1) - 1)
    def _finalize():
        o_ref[...] = (acc_ref[...] + b2_ref[...]).astype(o_ref.dtype)


# ----------------------------------------------------------------------------
# Wrapper
# ----------------------------------------------------------------------------
class PallasMLP:
    """Eval-mode ACMIL MLP: fc1 -> relu -> dropout(identity) -> fc2.

    Weights stored transposed vs PyTorch: w1 [in, hidden], w2 [hidden, out].
    """

    LANE = 128

    def __init__(self, w1, b1, w2, b2, *, compute_dtype=jnp.bfloat16,
                 max_resident_bytes=None):
        d, h = w1.shape
        h2, o = w2.shape
        assert h2 == h and b1.shape == (h,) and b2.shape == (o,)
        self.d, self.h, self.o = int(d), int(h), int(o)
        self.compute_dtype = compute_dtype

        # ---- generation-aware VMEM budgets ----------------------------------
        vmem_cap = 128 * 2**20                      # v5e/v6e default
        try:
            vmem_cap = int(pltpu.get_tpu_info().vmem_capacity_bytes)
        except Exception:
            pass
        self.vmem_cap = vmem_cap
        self.vmem_limit = max(32 * 2**20, min(vmem_cap * 3 // 4, 96 * 2**20))
        self.tile_budget = max(16 * 2**20, min(vmem_cap // 2, 64 * 2**20))
        self.small_vmem = vmem_cap <= 96 * 2**20    # v7x heuristic (64 MiB, 2 TCs)

        self.o_pad = _round_up(self.o, self.LANE)
        h_pad128 = _round_up(self.h, self.LANE)

        # bf16 weights + f32 biases, x2 for the pipeline's default double buffer.
        self.resident_bytes = 2 * ((self.d * h_pad128 + h_pad128 * self.o_pad) * 2
                                   + (h_pad128 + self.o_pad) * 4)
        limit = (self.tile_budget // 2 if max_resident_bytes is None
                 else max_resident_bytes)
        self.fast_path = self.resident_bytes <= limit

        if self.fast_path:
            self.tile_h = h_pad128
            self.h_pad = h_pad128
        else:
            # Streaming fallback: shrink tile_h first (weight re-reads scale with
            # the number of row tiles, not with tile_h).
            tile_h = 512
            while tile_h > self.LANE and self._stream_bytes(256, tile_h, 4) > self.tile_budget:
                tile_h //= 2
            self.tile_h = tile_h
            self.h_pad = _round_up(self.h, tile_h)
            # TODO(synk): extremely large input_dim would additionally need a
            # reduction grid axis over d; not required for ACMIL shapes.

        # ---- pad + cast parameters ONCE (kept as device arrays) --------------
        self.w1 = jnp.pad(w1, ((0, 0), (0, self.h_pad - self.h))).astype(compute_dtype)
        self.b1 = jnp.pad(b1, (0, self.h_pad - self.h)).astype(jnp.float32).reshape(1, -1)
        self.w2 = jnp.pad(w2, ((0, self.h_pad - self.h),
                               (0, self.o_pad - self.o))).astype(compute_dtype)
        self.b2 = jnp.pad(b2, (0, self.o_pad - self.o)).astype(jnp.float32).reshape(1, -1)

        self._forward = jax.jit(self._forward_impl)

    # ---- VMEM footprint models (bytes) ---------------------------------------
    def _fast_bytes(self, tile_n, out_isz):
        db = 2
        return (self.resident_bytes
                + tile_n * self.d * 4 * db
                + tile_n * self.o_pad * out_isz * db)

    def _stream_bytes(self, tile_n, tile_h, out_isz):
        db = 2
        return (tile_n * self.d * 4 * db            # x tile (f32, cast in kernel)
                + self.d * tile_h * 2 * db          # W1 column tile (bf16)
                + tile_h * 4 * db                   # b1 tile (f32)
                + tile_h * self.o_pad * 2 * db      # W2 row tile (bf16)
                + self.o_pad * 4 * db               # b2 (f32)
                + tile_n * self.o_pad * out_isz * db
                + tile_n * self.o_pad * 4)          # accumulator (worst case)

    def _pick_tile_n(self, n, out_isz):
        if n <= 256:
            tile_n = _round_up(n, 8)
        elif n <= 1024:
            tile_n = 256                            # v6e/v7x MXU is 256-wide
        else:
            tile_n = 512

        if self.fast_path:
            fits = lambda t: self._fast_bytes(t, out_isz)
        else:
            fits = lambda t: self._stream_bytes(t, self.tile_h, out_isz)
        while tile_n > 8 and fits(tile_n) > self.tile_budget:
            tile_n = max(8, _round_up(tile_n // 2, 8))

        # v7x: keep both TensorCores busy on the 'parallel' row axis.
        if self.small_vmem:
            while tile_n > 8 and pl.cdiv(n, tile_n) < 2:
                tile_n = max(8, _round_up(pl.cdiv(tile_n, 2), 8))
        return tile_n

    # ---- forward --------------------------------------------------------------
    def __call__(self, x):
        return self._forward(x)

    def _forward_impl(self, x):
        orig_shape = x.shape
        assert orig_shape[-1] == self.d
        x2 = x.reshape(-1, self.d)
        n = x2.shape[0]
        d = self.d
        out_dtype = x.dtype
        out_isz = jnp.dtype(out_dtype).itemsize

        tile_n = self._pick_tile_n(n, out_isz)
        n_tiles = pl.cdiv(n, tile_n)

        if self.fast_path:
            grid = (n_tiles,)
            in_specs = [
                pl.BlockSpec((tile_n, d), lambda i: (i, 0)),             # x rows
                pl.BlockSpec((d, self.h_pad), lambda i: (0, 0)),         # W1 resident
                pl.BlockSpec((1, self.h_pad), lambda i: (0, 0)),         # b1 resident
                pl.BlockSpec((self.h_pad, self.o_pad), lambda i: (0, 0)),  # W2 resident
                pl.BlockSpec((1, self.o_pad), lambda i: (0, 0)),         # b2 resident
            ]
            out_spec = pl.BlockSpec((tile_n, self.o_pad), lambda i: (i, 0))
            kernel = _mlp_kernel_resident
            scratch = []
            dims = ("parallel",)
            weight_reads = 1
        else:
            h_tiles = self.h_pad // self.tile_h
            w1_spec = pl.BlockSpec((d, self.tile_h), lambda i, j: (0, j))
            w2_spec = pl.BlockSpec((self.tile_h, self.o_pad), lambda i, j: (j, 0))
            if self.tile_budget >= 48 * 2**20 and h_tiles >= 3:
                # Large-VMEM chips (v5e/v6e): deeper weight buffering hides DMA.
                w1_spec = pl.BlockSpec((d, self.tile_h), lambda i, j: (0, j),
                                       pipeline_mode=pl.Buffered(3))
                w2_spec = pl.BlockSpec((self.tile_h, self.o_pad), lambda i, j: (j, 0),
                                       pipeline_mode=pl.Buffered(3))
            grid = (n_tiles, h_tiles)
            in_specs = [
                pl.BlockSpec((tile_n, d), lambda i, j: (i, 0)),
                w1_spec,
                pl.BlockSpec((1, self.tile_h), lambda i, j: (0, j)),
                w2_spec,
                pl.BlockSpec((1, self.o_pad), lambda i, j: (0, 0)),
            ]
            out_spec = pl.BlockSpec((tile_n, self.o_pad), lambda i, j: (i, 0))
            if out_dtype == jnp.float32:
                kernel = _mlp_kernel_stream_f32
                scratch = []
            else:
                kernel = _mlp_kernel_stream_acc
                scratch = [pltpu.VMEM((tile_n, self.o_pad), jnp.float32)]
            dims = ("parallel", "arbitrary")
            weight_reads = n_tiles

        weight_bytes = ((self.w1.size + self.w2.size) * 2
                        + (self.b1.size + self.b2.size) * 4) * weight_reads
        cost = pl.CostEstimate(
            flops=2 * n * (d * self.h_pad + self.h_pad * self.o_pad),
            transcendentals=0,
            bytes_accessed=int(x2.size * 4 + weight_bytes + n * self.o_pad * out_isz),
        )

        out = pl.pallas_call(
            kernel,
            out_shape=jax.ShapeDtypeStruct((n, self.o_pad), out_dtype),
            grid_spec=pltpu.PrefetchScalarGridSpec(
                num_scalar_prefetch=0,
                grid=grid,
                in_specs=in_specs,
                out_specs=out_spec,
                scratch_shapes=scratch,
            ),
            compiler_params=pltpu.CompilerParams(
                dimension_semantics=dims,
                vmem_limit_bytes=int(self.vmem_limit),
            ),
            cost_estimate=cost,
        )(x2, self.w1, self.b1, self.w2, self.b2)

        out = out[:, :self.o]
        return out.reshape(*orig_shape[:-1], self.o)


# ----------------------------------------------------------------------------
# Init / reference / test
# ----------------------------------------------------------------------------
def init_mlp_params(key, input_dim, hidden_dim, output_dim, dtype=jnp.float32):
    """Mimics nn.Linear's U(-1/sqrt(fan_in), +1/sqrt(fan_in)) init (transposed)."""
    k1, k2, k3, k4 = jax.random.split(key, 4)
    bound1 = 1.0 / (input_dim ** 0.5)
    bound2 = 1.0 / (hidden_dim ** 0.5)
    w1 = jax.random.uniform(k1, (input_dim, hidden_dim), dtype, -bound1, bound1)
    b1 = jax.random.uniform(k2, (hidden_dim,), dtype, -bound1, bound1)
    w2 = jax.random.uniform(k3, (hidden_dim, output_dim), dtype, -bound2, bound2)
    b2 = jax.random.uniform(k4, (output_dim,), dtype, -bound2, bound2)
    return w1, b1, w2, b2


def _reference(x, w1, b1, w2, b2):
    """Pure-JAX reference with matching bf16 MXU operand rounding, f32 accumulate."""
    bf = lambda a: a.astype(jnp.bfloat16).astype(jnp.float32)
    h = jnp.maximum(bf(x) @ bf(w1) + b1.reshape(1, -1), 0.0)
    return bf(h) @ bf(w2) + b2.reshape(1, -1)


if __name__ == "__main__":
    key = jax.random.PRNGKey(0)
    k_x, k_p, k_x2, k_p2 = jax.random.split(key, 4)

    # Case 1: small shapes consistent with MLP(input_dim, hidden_dim, output_dim).
    N, INPUT_DIM, HIDDEN_DIM, OUTPUT_DIM = 16, 32, 64, 8
    x = jax.random.normal(k_x, (N, INPUT_DIM), jnp.float32)
    w1, b1, w2, b2 = init_mlp_params(k_p, INPUT_DIM, HIDDEN_DIM, OUTPUT_DIM)
    mlp = PallasMLP(w1, b1, w2, b2)
    out = mlp(x)
    jax.block_until_ready(out)
    assert out.shape == (N, OUTPUT_DIM)
    ref = _reference(x, w1, b1, w2, b2)
    assert jnp.allclose(out, ref, atol=2e-2, rtol=2e-2), \
        float(jnp.max(jnp.abs(out - ref)))

    # Case 2: non-aligned N, hidden, output -> exercises row-block masking,
    # lane padding and the >=2 row blocks path.
    N2, D2, H2, O2 = 300, 256, 640, 10
    x2 = jax.random.normal(k_x2, (N2, D2), jnp.float32)
    p2 = init_mlp_params(k_p2, D2, H2, O2)
    mlp2 = PallasMLP(*p2)
    out2 = mlp2(x2)
    jax.block_until_ready(out2)
    assert out2.shape == (N2, O2)
    ref2 = _reference(x2, *p2)
    assert jnp.allclose(out2, ref2, atol=2e-2, rtol=2e-2), \
        float(jnp.max(jnp.abs(out2 - ref2)))

    # Case 3: force the streaming (hidden-reduction) fallback path so it is
    # compile/correctness-checked even though ACMIL shapes take the fast path.
    mlp3 = PallasMLP(*p2, max_resident_bytes=0)
    out3 = mlp3(x2)
    jax.block_until_ready(out3)
    assert out3.shape == (N2, O2)
    assert jnp.allclose(out3, ref2, atol=2e-2, rtol=2e-2), \
        float(jnp.max(jnp.abs(out3 - ref2)))

    print("KERNEL_OK")
</pallas_src>

<mosaic_0001>
module attributes {stable_mosaic.version = 11 : i64} {
  func.func @_mlp_kernel_resident(%arg0: i32, %arg1: memref<16x32xf32, #tpu.memory_space<vmem>>, %arg2: memref<32x128xbf16, #tpu.memory_space<vmem>>, %arg3: memref<1x128xf32, #tpu.memory_space<vmem>>, %arg4: memref<128x128xbf16, #tpu.memory_space<vmem>>, %arg5: memref<1x128xf32, #tpu.memory_space<vmem>>, %arg6: memref<16x128xf32, #tpu.memory_space<vmem>>) attributes {dimension_semantics = [#tpu.dimension_semantics<parallel>], iteration_bounds = array<i64: 1>, scalar_prefetch = 0 : i64, scratch_operands = 0 : i64, tpu.core_type = #tpu.core_type<tc>, window_params = [{transform_indices = @transform_0, window_bounds = array<i64: 16, 32>}, {pipeline_mode = #tpu.pipeline_mode<synchronous>, transform_indices = @transform_1, window_bounds = array<i64: 32, 128>}, {pipeline_mode = #tpu.pipeline_mode<synchronous>, transform_indices = @transform_2, window_bounds = array<i64: 1, 128>}, {pipeline_mode = #tpu.pipeline_mode<synchronous>, transform_indices = @transform_3, window_bounds = array<i64: 128, 128>}, {pipeline_mode = #tpu.pipeline_mode<synchronous>, transform_indices = @transform_4, window_bounds = array<i64: 1, 128>}, {transform_indices = @transform_5, window_bounds = array<i64: 16, 128>}]} {
    %c0 = arith.constant 0 : index
    %c0_0 = arith.constant 0 : index
    %0 = vector.load %arg1[%c0, %c0_0] : memref<16x32xf32, #tpu.memory_space<vmem>>, vector<16x32xf32>
    %1 = arith.truncf %0 : vector<16x32xf32> to vector<16x32xbf16>
    %c0_1 = arith.constant 0 : index
    %c0_2 = arith.constant 0 : index
    %2 = vector.load %arg2[%c0_1, %c0_2] : memref<32x128xbf16, #tpu.memory_space<vmem>>, vector<32x128xbf16>
    %cst = arith.constant dense<0.000000e+00> : vector<16x128xf32>
    %3 = tpu.matmul %1, %2, %cst {dimension_numbers = #tpu.dot_dimension_numbers<[1], [0], [0], [1], [0, 0, 1, 1], [], []>} : vector<16x32xbf16>, vector<32x128xbf16>, vector<16x128xf32> -> vector<16x128xf32>
    %c0_3 = arith.constant 0 : index
    %c0_4 = arith.constant 0 : index
    %4 = vector.load %arg3[%c0_3, %c0_4] : memref<1x128xf32, #tpu.memory_space<vmem>>, vector<1x128xf32>
    %5 = vector.broadcast %4 : vector<1x128xf32> to vector<16x128xf32>
    %6 = arith.addf %3, %5 : vector<16x128xf32>
    %cst_5 = arith.constant 0.000000e+00 : f32
    %7 = vector.broadcast %cst_5 : f32 to vector<16x128xf32>
    %8 = arith.maximumf %6, %7 : vector<16x128xf32>
    %9 = arith.truncf %8 : vector<16x128xf32> to vector<16x128xbf16>
    %c0_6 = arith.constant 0 : index
    %c0_7 = arith.constant 0 : index
    %10 = vector.load %arg4[%c0_6, %c0_7] : memref<128x128xbf16, #tpu.memory_space<vmem>>, vector<128x128xbf16>
    %cst_8 = arith.constant dense<0.000000e+00> : vector<16x128xf32>
    %11 = tpu.matmul %9, %10, %cst_8 {dimension_numbers = #tpu.dot_dimension_numbers<[1], [0], [0], [1], [0, 0, 1, 1], [], []>} : vector<16x128xbf16>, vector<128x128xbf16>, vector<16x128xf32> -> vector<16x128xf32>
    %c0_9 = arith.constant 0 : index
    %c0_10 = arith.constant 0 : index
    %12 = vector.load %arg5[%c0_9, %c0_10] : memref<1x128xf32, #tpu.memory_space<vmem>>, vector<1x128xf32>
    %13 = vector.broadcast %12 : vector<1x128xf32> to vector<16x128xf32>
    %14 = arith.addf %11, %13 : vector<16x128xf32>
    %c0_11 = arith.constant 0 : index
    %c0_12 = arith.constant 0 : index
    %15 = vector.load %arg6[%c0_11, %c0_12] : memref<16x128xf32, #tpu.memory_space<vmem>>, vector<16x128xf32>
    tpu.vector_store %arg6[%c0_11, %c0_12], %14 {strides = array<i32>} : memref<16x128xf32, #tpu.memory_space<vmem>>, vector<16x128xf32>,
    return
  }
  func.func @transform_0(%arg0: i32) -> (i32, i32) {
    %c0_i32 = arith.constant 0 : i32
    %c0_i32_0 = arith.constant 0 : i32
    return %arg0, %c0_i32 : i32, i32
  }
  func.func @transform_1(%arg0: i32) -> (i32, i32) {
    %c0_i32 = arith.constant 0 : i32
    %c0_i32_0 = arith.constant 0 : i32
    %c0_i32_1 = arith.constant 0 : i32
    return %c0_i32, %c0_i32_0 : i32, i32
  }
  func.func @transform_2(%arg0: i32) -> (i32, i32) {
    %c0_i32 = arith.constant 0 : i32
    %c0_i32_0 = arith.constant 0 : i32
    %c0_i32_1 = arith.constant 0 : i32
    return %c0_i32, %c0_i32_0 : i32, i32
  }
  func.func @transform_3(%arg0: i32) -> (i32, i32) {
    %c0_i32 = arith.constant 0 : i32
    %c0_i32_0 = arith.constant 0 : i32
    %c0_i32_1 = arith.constant 0 : i32
    return %c0_i32, %c0_i32_0 : i32, i32
  }
  func.func @transform_4(%arg0: i32) -> (i32, i32) {
    %c0_i32 = arith.constant 0 : i32
    %c0_i32_0 = arith.constant 0 : i32
    %c0_i32_1 = arith.constant 0 : i32
    return %c0_i32, %c0_i32_0 : i32, i32
  }
  func.func @transform_5(%arg0: i32) -> (i32, i32) {
    %c0_i32 = arith.constant 0 : i32
    %c0_i32_0 = arith.constant 0 : i32
    return %arg0, %c0_i32 : i32, i32
  }
}

</mosaic_0001>

<llo_original>
// kernel: _forward_impl.1
$region0: #{_forward_impl.1}
  #allocation0 [shape = 'u32[]', space=smem, size = 0x4, offset = 0x4, fixed_abs, tag = 'smem constant byte address 0x4 - core index']
  #allocation1 [shape = 'u32[144,128]{1,0:T(1,128)}', space=vmem, size = 0x12000, scoped, tag = 'internal scratch']
  %s0 = inlined_call_operand.hbm [shape: f32[16,32], index: 0, kind: input, shape index: {}]
  %s1 = inlined_call_operand.hbm [shape: bf16[32,128], index: 1, kind: input, shape index: {}]
  %s2 = inlined_call_operand.vmem [shape: f32[1,128], index: 2, kind: input, shape index: {}]
  %s3 = inlined_call_operand.hbm [shape: bf16[128,128], index: 3, kind: input, shape index: {}]
  %s4 = inlined_call_operand.vmem [shape: f32[1,128], index: 4, kind: input, shape index: {}]
  %s5 = inlined_call_operand.vmem [shape: f32[16,128], index: 5, kind: output, shape index: {}]
  %s6 = sld [smem:[#allocation0]]
  $region42: #{_forward_impl.1} parent=0
    _
  %s8 = ssub.s32 1, %s6
  %s9 = scalar_select 0, %s8, %s6
  $region1: #{_forward_impl.1} parent=0
    #allocation2 [shape = 'u8[8192]{0}', space=vmem, size = 0x2000, scoped, tag = 'input window, operand 0, single buffered']
    #allocation3 [shape = 's32[1]{0}', space=sflag, size = 0x4, scoped, tag = 'scoped memory for _forward_impl.1']
    #allocation4 [shape = 'u8[8192]{0}', space=vmem, size = 0x2000, scoped, tag = 'input window, operand 1, single buffered']
    #allocation5 [shape = 's32[1]{0}', space=sflag, size = 0x4, scoped, tag = 'scoped memory for _forward_impl.1']
    #allocation6 [shape = 'u8[32768]{0}', space=vmem, size = 0x8000, scoped, tag = 'input window, operand 3, single buffered']
    %10 = vsyncpa [#allocation3], 0
    %11 = vsyncpa [#allocation5], 0
    // Predicated region
    $region2: #{_forward_impl.1} parent=1 // pred_check
      _
    $region3: #{_forward_impl.1} parent=1 // pred_check_branch
      %13 = sbr.rel (0) target = $region5
    $region4: #{_forward_impl.1} parent=1 // pred_region
      %s15 = ssub.s32 256, 256
      %16 = vsyncadd [#allocation3], %s15
      %s17 = sshll.u32 [#allocation2], 4
      %s18 = int_to_ptr.vmem [resolvable:$true] %s17
      %23 = dma.hbm_to_vmem [thread:$0]  %s0, 256, %s18, [#allocation3], 128, 128, 8
    $region5: #{_forward_impl.1} parent=1 // pred_fallthru
      _
    // Predicated region
    $region6: #{_forward_impl.1} parent=1 // pred_check
      _
    $region7: #{_forward_impl.1} parent=1 // pred_check_branch
      %25 = sbr.rel (0) target = $region9
    $region8: #{_forward_impl.1} parent=1 // pred_region
      %s27 = ssub.s32 256, 256
      %28 = vsyncadd [#allocation5], %s27
      %s29 = sshll.u32 [#allocation4], 4
      %s30 = int_to_ptr.vmem [resolvable:$true] %s29
      %35 = dma.hbm_to_vmem [thread:$0]  %s1, 256, %s30, [#allocation5], 64, 64, 4
    $region9: #{_forward_impl.1} parent=1 // pred_fallthru
      _
    // Predicated region
    $region10: #{_forward_impl.1} parent=1 // pred_check
      _
    $region11: #{_forward_impl.1} parent=1 // pred_check_branch
      %37 = sbr.rel (0) target = $region13
    $region12: #{_forward_impl.1} parent=1 // pred_region
      _
    $region13: #{_forward_impl.1} parent=1 // pred_fallthru
      _
    // Predicated region
    $region14: #{_forward_impl.1} parent=1 // pred_check
      _
    $region15: #{_forward_impl.1} parent=1 // pred_check_branch
      %39 = sbr.rel (0) target = $region17
    $region16: #{_forward_impl.1} parent=1 // pred_region
      %s41 = ssub.s32 1024, 1024
      %42 = vsyncadd [#allocation5], %s41
      %s43 = sshll.u32 [#allocation6], 4
      %s44 = int_to_ptr.vmem [resolvable:$true] %s43
      %49 = dma.hbm_to_vmem [thread:$0]  %s3, 1024, %s44, [#allocation5], 64, 64, 4
    $region17: #{_forward_impl.1} parent=1 // pred_fallthru
      _
    // Predicated region
    $region18: #{_forward_impl.1} parent=1 // pred_check
      _
    $region19: #{_forward_impl.1} parent=1 // pred_check_branch
      %51 = sbr.rel (0) target = $region21
    $region20: #{_forward_impl.1} parent=1 // pred_region
      _
    $region21: #{_forward_impl.1} parent=1 // pred_fallthru
      _
    // Predicated region
    $region22: #{_forward_impl.1} parent=1 // pred_check
      _
    $region23: #{_forward_impl.1} parent=1 // pred_check_branch
      %53 = sbr.rel (0) target = $region25
    $region24: #{_forward_impl.1} parent=1 // pred_region
      %54 = dma.done [#allocation3], 256
    $region25: #{_forward_impl.1} parent=1 // pred_fallthru
      _
    // Predicated region
    $region26: #{_forward_impl.1} parent=1 // pred_check
      _
    $region27: #{_forward_impl.1} parent=1 // pred_check_branch
      %56 = sbr.rel (0) target = $region29
    $region28: #{_forward_impl.1} parent=1 // pred_region
      %57 = dma.done [#allocation5], 256
    $region29: #{_forward_impl.1} parent=1 // pred_fallthru
      _
    // Predicated region
    $region30: #{_forward_impl.1} parent=1 // pred_check
      _
    $region31: #{_forward_impl.1} parent=1 // pred_check_branch
      %59 = sbr.rel (0) target = $region33
    $region32: #{_forward_impl.1} parent=1 // pred_region
      %60 = dma.done [#allocation5], 1024
    $region33: #{_forward_impl.1} parent=1 // pred_fallthru
      _
    %v62 = vld [vmem:[#allocation2] sm:$0xff]
    %v63 = vld [vmem:[#allocation2 + $0x8] sm:$0xff]
    %v64 = vpack.c.bf16 %v63, %v62
    %v65 = vld [vmem:[#allocation4] sm:$0xf]
    %v66 = vld [vmem:[#allocation4 + $0x4] sm:$0xf]
    %v67 = vld [vmem:[#allocation4 + $0x8] sm:$0xf]
    %v68 = vld [vmem:[#allocation4 + $0xc] sm:$0xf]
    %v69 = vld [vmem:[%s2] sm:$0x1]
    %v71 = vlaneseq
    %v72 = vshrl.u32 %v71, 7
    %v73 = vsub.s32 0, %v72
    %v74 = vrot.slane %v69, %v73
    %v80 = vunpack.c.l.b16 %v65
    %v81 = vunpack.c.l.b16 %v66
    %v82 = vunpack.c.l.b16 %v67
    %v83 = vunpack.c.l.b16 %v68
    %v84 = vpack.c.b16 %v81, %v80
    %v85 = vpack.c.b16 %v83, %v82
    %vm88 = vcmask 261120
    %v90 = vsel %vm88, %v64, 0
    %92 = vmatprep.subr.bf16.mxu0 0
    %93 = vmatpush1.bf16.msra.mxu0 0
    %94 = vmatprep.subr.bf16.mxu0 0
    %95 = vmatpush1.bf16.msra.mxu0 0
    %96 = vmatprep.subr.bf16.mxu0 0
    %97 = vmatpush1.bf16.msra.mxu0 0
    %98 = vmatprep.subr.bf16.mxu0 0
    %99 = vmatpush1.bf16.msra.mxu0 0
    %100 = vmatprep.subr.bf16.mxu0 0
    %101 = vmatpush1.bf16.msra.mxu0 0
    %102 = vmatprep.subr.bf16.mxu0 0
    %103 = vmatpush1.bf16.msra.mxu0 0
    %104 = vmatprep.subr.bf16.mxu0 0
    %105 = vmatpush1.bf16.msra.mxu0 %v85
    %106 = vmatprep.subr.bf16.mxu0 0
    %107 = vmatpush1.bf16.msra.mxu0 %v84
    %108 = vmatprep.subr.bf16.mxu0 0
    %109 = vmatpush2.bf16.msra.mxu0 0
    %110 = vmatprep.subr.bf16.mxu0 0
    %111 = vmatpush2.bf16.msra.mxu0 0
    %112 = vmatprep.subr.bf16.mxu0 0
    %113 = vmatpush2.bf16.msra.mxu0 0
    %114 = vmatprep.subr.bf16.mxu0 0
    %115 = vmatpush2.bf16.msra.mxu0 0
    %116 = vmatprep.subr.bf16.mxu0 0
    %117 = vmatpush2.bf16.msra.mxu0 0
    %118 = vmatprep.subr.bf16.mxu0 0
    %119 = vmatpush2.bf16.msra.mxu0 0
    %120 = vmatprep.subr.bf16.mxu0 0
    %121 = vmatpush2.bf16.msra.mxu0 0
    %122 = vmatprep.subr.bf16.mxu0 0
    %123 = vmatpush2.bf16.msra.mxu0 0
    %124 = vmatprep.mubr.bf16.mxu0 0
    %125 = vmatmul.mubr.bf16.gmra.mxu0 %v90
    %v126 = vpop.f32.mrf.mxu0
    %v127 = vadd.f32 %v74, %v126
    %v128 = vpop.f32.mrf.mxu0
    %v129 = vpop.f32.mrf.mxu0
    %v130 = vadd.f32 %v74, %v129
    %v131 = vpop.f32.mrf.mxu0
    %132 = vdwg.mxu0
    %v133 = vmax.f32 %v127, 0.0
    %v134 = vmax.f32 %v130, 0.0
    %v135 = vpack.c.bf16 %v134, %v133
    %v136 = vld [vmem:[#allocation6] sm:$0xf]
    %v137 = vld [vmem:[#allocation6 + $0x4] sm:$0xf]
    %v138 = vld [vmem:[#allocation6 + $0x8] sm:$0xf]
    %v139 = vld [vmem:[#allocation6 + $0xc] sm:$0xf]
    %v140 = vld [vmem:[#allocation6 + $0x10] sm:$0xf]
    %v141 = vld [vmem:[#allocation6 + $0x14] sm:$0xf]
    %v142 = vld [vmem:[#allocation6 + $0x18] sm:$0xf]
    %v143 = vld [vmem:[#allocation6 + $0x1c] sm:$0xf]
    %v144 = vld [vmem:[#allocation6 + $0x20] sm:$0xf]
    %v145 = vld [vmem:[#allocation6 + $0x24] sm:$0xf]
    %v146 = vld [vmem:[#allocation6 + $0x28] sm:$0xf]
    %v147 = vld [vmem:[#allocation6 + $0x2c] sm:$0xf]
    %v148 = vld [vmem:[#allocation6 + $0x30] sm:$0xf]
    %v149 = vld [vmem:[#allocation6 + $0x34] sm:$0xf]
    %v150 = vld [vmem:[#allocation6 + $0x38] sm:$0xf]
    %v151 = vld [vmem:[#allocation6 + $0x3c] sm:$0xf]
    %v152 = vld [vmem:[%s4] sm:$0x1]
    %v154 = vlaneseq
    %v155 = vshrl.u32 %v154, 7
    %v156 = vsub.s32 0, %v155
    %v157 = vrot.slane %v152, %v156
    %v175 = vunpack.c.l.b16 %v136
    %v176 = vunpack.c.l.b16 %v137
    %v177 = vunpack.c.l.b16 %v138
    %v178 = vunpack.c.l.b16 %v139
    %v179 = vunpack.c.l.b16 %v140
    %v180 = vunpack.c.l.b16 %v141
    %v181 = vunpack.c.l.b16 %v142
    %v182 = vunpack.c.l.b16 %v143
    %v183 = vunpack.c.l.b16 %v144
    %v184 = vunpack.c.l.b16 %v145
    %v185 = vunpack.c.l.b16 %v146
    %v186 = vunpack.c.l.b16 %v147
    %v187 = vunpack.c.l.b16 %v148
    %v188 = vunpack.c.l.b16 %v149
    %v189 = vunpack.c.l.b16 %v150
    %v190 = vunpack.c.l.b16 %v151
    %v191 = vpack.c.b16 %v176, %v175
    %v192 = vpack.c.b16 %v178, %v177
    %v193 = vpack.c.b16 %v180, %v179
    %v194 = vpack.c.b16 %v182, %v181
    %v195 = vpack.c.b16 %v184, %v183
    %v196 = vpack.c.b16 %v186, %v185
    %v197 = vpack.c.b16 %v188, %v187
    %v198 = vpack.c.b16 %v190, %v189
    %207 = vmatprep.subr.bf16.mxu0 0
    %208 = vmatpush1.bf16.msra.mxu0 %v198
    %209 = vmatprep.subr.bf16.mxu0 0
    %210 = vmatpush1.bf16.msra.mxu0 %v197
    %211 = vmatprep.subr.bf16.mxu0 0
    %212 = vmatpush1.bf16.msra.mxu0 %v196
    %213 = vmatprep.subr.bf16.mxu0 0
    %214 = vmatpush1.bf16.msra.mxu0 %v195
    %215 = vmatprep.subr.bf16.mxu0 0
    %216 = vmatpush1.bf16.msra.mxu0 %v194
    %217 = vmatprep.subr.bf16.mxu0 0
    %218 = vmatpush1.bf16.msra.mxu0 %v193
    %219 = vmatprep.subr.bf16.mxu0 0
    %220 = vmatpush1.bf16.msra.mxu0 %v192
    %221 = vmatprep.subr.bf16.mxu0 0
    %222 = vmatpush1.bf16.msra.mxu0 %v191
    %223 = vmatprep.subr.bf16.mxu0 0
    %224 = vmatpush2.bf16.msra.mxu0 0
    %225 = vmatprep.subr.bf16.mxu0 0
    %226 = vmatpush2.bf16.msra.mxu0 0
    %227 = vmatprep.subr.bf16.mxu0 0
    %228 = vmatpush2.bf16.msra.mxu0 0
    %229 = vmatprep.subr.bf16.mxu0 0
    %230 = vmatpush2.bf16.msra.mxu0 0
    %231 = vmatprep.subr.bf16.mxu0 0
    %232 = vmatpush2.bf16.msra.mxu0 0
    %233 = vmatprep.subr.bf16.mxu0 0
    %234 = vmatpush2.bf16.msra.mxu0 0
    %235 = vmatprep.subr.bf16.mxu0 0
    %236 = vmatpush2.bf16.msra.mxu0 0
    %237 = vmatprep.subr.bf16.mxu0 0
    %238 = vmatpush2.bf16.msra.mxu0 0
    %239 = vmatprep.mubr.bf16.mxu0 0
    %240 = vmatmul.mubr.bf16.gmra.mxu0 %v135
    %v241 = vpop.f32.mrf.mxu0
    %v242 = vadd.f32 %v157, %v241
    %v243 = vpop.f32.mrf.mxu0
    %v244 = vpop.f32.mrf.mxu0
    %v245 = vadd.f32 %v157, %v244
    %v246 = vpop.f32.mrf.mxu0
    %247 = vdwg.mxu0
    %248 = vst [vmem:[%s5] sm:$0xff] %v242
    %249 = vst [vmem:[%s5 + $0x8] sm:$0xff] %v245
    // Predicated region
    $region34: #{_forward_impl.1} parent=1 // pred_check
      _
    $region35: #{_forward_impl.1} parent=1 // pred_check_branch
      %251 = sbr.rel (0) target = $region37
    $region36: #{_forward_impl.1} parent=1 // pred_region
      _
    $region37: #{_forward_impl.1} parent=1 // pred_fallthru
      _
    // Predicated region
    $region38: #{_forward_impl.1} parent=1 // pred_check
      _
    $region39: #{_forward_impl.1} parent=1 // pred_check_branch
      %253 = sbr.rel (0) target = $region41
    $region40: #{_forward_impl.1} parent=1 // pred_region
      _
    $region41: #{_forward_impl.1} parent=1 // pred_fallthru
      _
    %254 = vsyncpa [#allocation3], 1
    %255 = vsyncpa [#allocation5], 1

</llo_original>
